<compile_context>
chip_gen: v7x
topology: tpu7x:2x2x1
jax: 0.10.0
libtpu: 0.0.40
codegen_flags: <defaults>
</compile_context>

<pallas_src>
import functools

import jax
import jax.numpy as jnp
from jax.experimental import pallas as pl
from jax.experimental.pallas import tpu as pltpu

STATE_DIM = 2      # MountainCarContinuous observation dim
ACTION_DIM = 1     # MountainCarContinuous action dim
HIDDEN_DIM = 256
ACT_LIMIT = 1.0

PAD_K = 8          # padded input-feature dim (sublane-aligned, cheap)
PAD_N = 128        # padded fc3 output width inside the kernel (lane-aligned)
MAX_TB = 256       # max batch tile (keeps working set << 64 MiB v7x VMEM)


def _round_up(x, m):
    return ((x + m - 1) // m) * m


def actor_kernel(x_ref, w1_ref, b1_ref, w2_ref, b2_ref, w3_ref, b3_ref, o_ref):
    """Fused 3-layer MLP on one batch tile: relu/relu/tanh, store action col 0."""
    x = x_ref[...]                                                  # (TB, 8)
    h1 = jnp.dot(x, w1_ref[...], preferred_element_type=jnp.float32) + b1_ref[...]
    h1 = jnp.maximum(h1, 0.0)                                       # (TB, 256)
    h2 = jnp.dot(h1, w2_ref[...], preferred_element_type=jnp.float32) + b2_ref[...]
    h2 = jnp.maximum(h2, 0.0)                                       # (TB, 256)
    a = jnp.dot(h2, w3_ref[...], preferred_element_type=jnp.float32) + b3_ref[...]
    # Only column 0 is a real action (w3/b3 padding columns are zero).
    o_ref[...] = ACT_LIMIT * jnp.tanh(a[:, :ACTION_DIM])            # (TB, 1)


def init_actor_params(key, state_dim=STATE_DIM, action_dim=ACTION_DIM,
                      hidden_dim=HIDDEN_DIM):
    """nn.Linear-style init: U(-1/sqrt(fan_in), 1/sqrt(fan_in)).

    Weights in (in_features, out_features) layout, biases as (1, out_features).
    """
    ks = jax.random.split(key, 6)

    def lin(kw, kb, fan_in, fan_out):
        bound = 1.0 / jnp.sqrt(jnp.float32(fan_in))
        w = jax.random.uniform(kw, (fan_in, fan_out), jnp.float32, -bound, bound)
        b = jax.random.uniform(kb, (1, fan_out), jnp.float32, -bound, bound)
        return w, b

    w1, b1 = lin(ks[0], ks[1], state_dim, hidden_dim)
    w2, b2 = lin(ks[2], ks[3], hidden_dim, hidden_dim)
    w3, b3 = lin(ks[4], ks[5], hidden_dim, action_dim)
    return (w1, b1, w2, b2, w3, b3)


def prepare_actor_params(params):
    """One-time padding of the tiny dims (done at init, NOT per forward call)."""
    w1, b1, w2, b2, w3, b3 = params
    w1_p = jnp.zeros((PAD_K, HIDDEN_DIM), jnp.float32).at[:STATE_DIM, :].set(w1)
    w3_p = jnp.zeros((HIDDEN_DIM, PAD_N), jnp.float32).at[:, :ACTION_DIM].set(w3)
    b3_p = jnp.zeros((1, PAD_N), jnp.float32).at[:, :ACTION_DIM].set(b3)
    return (w1_p, b1, w2, b2, w3_p, b3_p)


@jax.jit
def actor_forward(state, padded_params):
    """state: (B, STATE_DIM) float32 -> action: (B, ACTION_DIM) float32."""
    w1_p, b1, w2, b2, w3_p, b3_p = padded_params
    B = state.shape[0]

    # Batch tile: whole (rounded) batch if small, else MAX_TB rows per grid step.
    if B <= MAX_TB:
        TB = _round_up(max(B, 1), 8)
    else:
        TB = MAX_TB
    B_pad = _round_up(B, TB)

    # Single per-call pad op: rounds the batch AND widens features 2 -> 8.
    x_p = jnp.zeros((B_pad, PAD_K), jnp.float32).at[:B, :STATE_DIM].set(state)

    grid = (B_pad // TB,)
    const = lambda i: (0, 0)   # weights/biases stay VMEM-resident across the grid

    out = pl.pallas_call(
        actor_kernel,
        out_shape=jax.ShapeDtypeStruct((B_pad, ACTION_DIM), jnp.float32),
        grid=grid,
        in_specs=[
            pl.BlockSpec((TB, PAD_K), lambda i: (i, 0)),            # x tile
            pl.BlockSpec((PAD_K, HIDDEN_DIM), const),               # w1
            pl.BlockSpec((1, HIDDEN_DIM), const),                   # b1
            pl.BlockSpec((HIDDEN_DIM, HIDDEN_DIM), const),          # w2
            pl.BlockSpec((1, HIDDEN_DIM), const),                   # b2
            pl.BlockSpec((HIDDEN_DIM, PAD_N), const),               # w3 (padded)
            pl.BlockSpec((1, PAD_N), const),                        # b3 (padded)
        ],
        out_specs=pl.BlockSpec((TB, ACTION_DIM), lambda i: (i, 0)),
        compiler_params=pltpu.CompilerParams(
            dimension_semantics=("parallel",)),
    )(x_p, w1_p, b1, w2, b2, w3_p, b3_p)

    return out[:B]


def actor_forward_ref(state, params):
    """Pure-JAX reference for correctness check (unpadded params)."""
    w1, b1, w2, b2, w3, b3 = params
    h1 = jnp.maximum(state @ w1 + b1, 0.0)
    h2 = jnp.maximum(h1 @ w2 + b2, 0.0)
    return ACT_LIMIT * jnp.tanh(h2 @ w3 + b3)


if __name__ == "__main__":
    key = jax.random.PRNGKey(0)
    k_param, k_state, k_state2 = jax.random.split(key, 3)

    params = init_actor_params(k_param)
    padded_params = prepare_actor_params(params)   # one-time, hoisted out of calls

    # Small inference-style batch.
    batch = 2
    state = jax.random.uniform(
        k_state, (batch, STATE_DIM), jnp.float32, minval=-1.0, maxval=1.0)
    action = jax.block_until_ready(actor_forward(state, padded_params))
    ref = actor_forward_ref(state, params)
    assert action.shape == (batch, ACTION_DIM)
    assert jnp.allclose(action, ref, atol=1e-5, rtol=1e-5)

    # Larger batch: exercises the batch grid (>1 tile) and ragged-tail padding.
    batch2 = 300
    state2 = jax.random.uniform(
        k_state2, (batch2, STATE_DIM), jnp.float32, minval=-1.0, maxval=1.0)
    action2 = jax.block_until_ready(actor_forward(state2, padded_params))
    ref2 = actor_forward_ref(state2, params)
    assert action2.shape == (batch2, ACTION_DIM)
    assert jnp.allclose(action2, ref2, atol=1e-5, rtol=1e-5)

    print("KERNEL_OK")
</pallas_src>

<mosaic_0001>
module attributes {stable_mosaic.version = 11 : i64} {
  func.func @actor_kernel(%arg0: i32, %arg1: memref<8x8xf32, #tpu.memory_space<vmem>>, %arg2: memref<8x256xf32, #tpu.memory_space<vmem>>, %arg3: memref<1x256xf32, #tpu.memory_space<vmem>>, %arg4: memref<256x256xf32, #tpu.memory_space<vmem>>, %arg5: memref<1x256xf32, #tpu.memory_space<vmem>>, %arg6: memref<256x128xf32, #tpu.memory_space<vmem>>, %arg7: memref<1x128xf32, #tpu.memory_space<vmem>>, %arg8: memref<8x1xf32, #tpu.memory_space<vmem>>) attributes {dimension_semantics = [#tpu.dimension_semantics<parallel>], iteration_bounds = array<i64: 1>, scalar_prefetch = 0 : i64, scratch_operands = 0 : i64, tpu.core_type = #tpu.core_type<tc>, window_params = [{transform_indices = @transform_0, window_bounds = array<i64: 8, 8>}, {pipeline_mode = #tpu.pipeline_mode<synchronous>, transform_indices = @transform_1, window_bounds = array<i64: 8, 256>}, {pipeline_mode = #tpu.pipeline_mode<synchronous>, transform_indices = @transform_2, window_bounds = array<i64: 1, 256>}, {pipeline_mode = #tpu.pipeline_mode<synchronous>, transform_indices = @transform_3, window_bounds = array<i64: 256, 256>}, {pipeline_mode = #tpu.pipeline_mode<synchronous>, transform_indices = @transform_4, window_bounds = array<i64: 1, 256>}, {pipeline_mode = #tpu.pipeline_mode<synchronous>, transform_indices = @transform_5, window_bounds = array<i64: 256, 128>}, {pipeline_mode = #tpu.pipeline_mode<synchronous>, transform_indices = @transform_6, window_bounds = array<i64: 1, 128>}, {transform_indices = @transform_7, window_bounds = array<i64: 8, 1>}]} {
    %c0 = arith.constant 0 : index
    %c0_0 = arith.constant 0 : index
    %0 = vector.load %arg1[%c0, %c0_0] : memref<8x8xf32, #tpu.memory_space<vmem>>, vector<8x8xf32>
    %c0_1 = arith.constant 0 : index
    %c0_2 = arith.constant 0 : index
    %1 = vector.load %arg2[%c0_1, %c0_2] : memref<8x256xf32, #tpu.memory_space<vmem>>, vector<8x256xf32>
    %cst = arith.constant dense<0.000000e+00> : vector<8x256xf32>
    %2 = tpu.matmul %0, %1, %cst {dimension_numbers = #tpu.dot_dimension_numbers<[1], [0], [0], [1], [0, 0, 1, 1], [], []>} : vector<8x8xf32>, vector<8x256xf32>, vector<8x256xf32> -> vector<8x256xf32>
    %c0_3 = arith.constant 0 : index
    %c0_4 = arith.constant 0 : index
    %3 = vector.load %arg3[%c0_3, %c0_4] : memref<1x256xf32, #tpu.memory_space<vmem>>, vector<1x256xf32>
    %4 = vector.broadcast %3 : vector<1x256xf32> to vector<8x256xf32>
    %5 = arith.addf %2, %4 : vector<8x256xf32>
    %cst_5 = arith.constant 0.000000e+00 : f32
    %6 = vector.broadcast %cst_5 : f32 to vector<8x256xf32>
    %7 = arith.maximumf %5, %6 : vector<8x256xf32>
    %c0_6 = arith.constant 0 : index
    %c0_7 = arith.constant 0 : index
    %8 = vector.load %arg4[%c0_6, %c0_7] : memref<256x256xf32, #tpu.memory_space<vmem>>, vector<256x256xf32>
    %cst_8 = arith.constant dense<0.000000e+00> : vector<8x256xf32>
    %9 = tpu.matmul %7, %8, %cst_8 {dimension_numbers = #tpu.dot_dimension_numbers<[1], [0], [0], [1], [0, 0, 1, 1], [], []>} : vector<8x256xf32>, vector<256x256xf32>, vector<8x256xf32> -> vector<8x256xf32>
    %c0_9 = arith.constant 0 : index
    %c0_10 = arith.constant 0 : index
    %10 = vector.load %arg5[%c0_9, %c0_10] : memref<1x256xf32, #tpu.memory_space<vmem>>, vector<1x256xf32>
    %11 = vector.broadcast %10 : vector<1x256xf32> to vector<8x256xf32>
    %12 = arith.addf %9, %11 : vector<8x256xf32>
    %cst_11 = arith.constant 0.000000e+00 : f32
    %13 = vector.broadcast %cst_11 : f32 to vector<8x256xf32>
    %14 = arith.maximumf %12, %13 : vector<8x256xf32>
    %c0_12 = arith.constant 0 : index
    %c0_13 = arith.constant 0 : index
    %15 = vector.load %arg6[%c0_12, %c0_13] : memref<256x128xf32, #tpu.memory_space<vmem>>, vector<256x128xf32>
    %cst_14 = arith.constant dense<0.000000e+00> : vector<8x128xf32>
    %16 = tpu.matmul %14, %15, %cst_14 {dimension_numbers = #tpu.dot_dimension_numbers<[1], [0], [0], [1], [0, 0, 1, 1], [], []>} : vector<8x256xf32>, vector<256x128xf32>, vector<8x128xf32> -> vector<8x128xf32>
    %c0_15 = arith.constant 0 : index
    %c0_16 = arith.constant 0 : index
    %17 = vector.load %arg7[%c0_15, %c0_16] : memref<1x128xf32, #tpu.memory_space<vmem>>, vector<1x128xf32>
    %18 = vector.broadcast %17 : vector<1x128xf32> to vector<8x128xf32>
    %19 = arith.addf %16, %18 : vector<8x128xf32>
    %20 = vector.extract_strided_slice %19 {offsets = [0, 0], sizes = [8, 1], strides = [1, 1]} : vector<8x128xf32> to vector<8x1xf32>
    %21 = math.tanh %20 : vector<8x1xf32>
    %cst_17 = arith.constant 1.000000e+00 : f32
    %22 = vector.broadcast %cst_17 : f32 to vector<8x1xf32>
    %23 = arith.mulf %22, %21 : vector<8x1xf32>
    %c0_18 = arith.constant 0 : index
    %c0_19 = arith.constant 0 : index
    %24 = vector.load %arg8[%c0_18, %c0_19] : memref<8x1xf32, #tpu.memory_space<vmem>>, vector<8x1xf32>
    tpu.vector_store %arg8[%c0_18, %c0_19], %23 {strides = array<i32>} : memref<8x1xf32, #tpu.memory_space<vmem>>, vector<8x1xf32>,
    return
  }
  func.func @transform_0(%arg0: i32) -> (i32, i32) {
    %c0_i32 = arith.constant 0 : i32
    %c0_i32_0 = arith.constant 0 : i32
    return %arg0, %c0_i32 : i32, i32
  }
  func.func @transform_1(%arg0: i32) -> (i32, i32) {
    %c0_i32 = arith.constant 0 : i32
    %c0_i32_0 = arith.constant 0 : i32
    %c0_i32_1 = arith.constant 0 : i32
    return %c0_i32, %c0_i32_0 : i32, i32
  }
  func.func @transform_2(%arg0: i32) -> (i32, i32) {
    %c0_i32 = arith.constant 0 : i32
    %c0_i32_0 = arith.constant 0 : i32
    %c0_i32_1 = arith.constant 0 : i32
    return %c0_i32, %c0_i32_0 : i32, i32
  }
  func.func @transform_3(%arg0: i32) -> (i32, i32) {
    %c0_i32 = arith.constant 0 : i32
    %c0_i32_0 = arith.constant 0 : i32
    %c0_i32_1 = arith.constant 0 : i32
    return %c0_i32, %c0_i32_0 : i32, i32
  }
  func.func @transform_4(%arg0: i32) -> (i32, i32) {
    %c0_i32 = arith.constant 0 : i32
    %c0_i32_0 = arith.constant 0 : i32
    %c0_i32_1 = arith.constant 0 : i32
    return %c0_i32, %c0_i32_0 : i32, i32
  }
  func.func @transform_5(%arg0: i32) -> (i32, i32) {
    %c0_i32 = arith.constant 0 : i32
    %c0_i32_0 = arith.constant 0 : i32
    %c0_i32_1 = arith.constant 0 : i32
    return %c0_i32, %c0_i32_0 : i32, i32
  }
  func.func @transform_6(%arg0: i32) -> (i32, i32) {
    %c0_i32 = arith.constant 0 : i32
    %c0_i32_0 = arith.constant 0 : i32
    %c0_i32_1 = arith.constant 0 : i32
    return %c0_i32, %c0_i32_0 : i32, i32
  }
  func.func @transform_7(%arg0: i32) -> (i32, i32) {
    %c0_i32 = arith.constant 0 : i32
    %c0_i32_0 = arith.constant 0 : i32
    return %arg0, %c0_i32 : i32, i32
  }
}

</mosaic_0001>

<llo_original>
// kernel: actor_forward.1
$region0: #{actor_forward.1}
  #allocation0 [shape = 'u32[]', space=smem, size = 0x4, offset = 0x4, fixed_abs, tag = 'smem constant byte address 0x4 - core index']
  #allocation1 [shape = 'u32[144,128]{1,0:T(1,128)}', space=vmem, size = 0x12000, scoped, tag = 'internal scratch']
  %s0 = inlined_call_operand.vmem [shape: f32[8,8], index: 0, kind: input, shape index: {}]
  %s1 = inlined_call_operand.hbm [shape: f32[8,256], index: 1, kind: input, shape index: {}]
  %s2 = inlined_call_operand.vmem [shape: f32[1,256], index: 2, kind: input, shape index: {}]
  %s3 = inlined_call_operand.hbm [shape: f32[256,256], index: 3, kind: input, shape index: {}]
  %s4 = inlined_call_operand.vmem [shape: f32[1,256], index: 4, kind: input, shape index: {}]
  %s5 = inlined_call_operand.hbm [shape: f32[256,128], index: 5, kind: input, shape index: {}]
  %s6 = inlined_call_operand.vmem [shape: f32[1,128], index: 6, kind: input, shape index: {}]
  %s7 = inlined_call_operand.vmem [shape: f32[8,1], index: 7, kind: output, shape index: {}]
  %s8 = sld [smem:[#allocation0]]
  $region50: #{actor_forward.1} parent=0
    _
  %s10 = ssub.s32 1, %s8
  %s11 = scalar_select 0, %s10, %s8
  $region1: #{actor_forward.1} parent=0
    #allocation2 [shape = 'u8[8192]{0}', space=vmem, size = 0x2000, scoped, tag = 'input window, operand 1, single buffered']
    #allocation3 [shape = 's32[1]{0}', space=sflag, size = 0x4, scoped, tag = 'scoped memory for actor_forward.1']
    #allocation4 [shape = 'u8[262144]{0}', space=vmem, size = 0x40000, scoped, tag = 'input window, operand 3, single buffered']
    #allocation5 [shape = 's32[1]{0}', space=sflag, size = 0x4, scoped, tag = 'scoped memory for actor_forward.1']
    #allocation6 [shape = 'u8[131072]{0}', space=vmem, size = 0x20000, scoped, tag = 'input window, operand 5, single buffered']
    %12 = vsyncpa [#allocation3], 0
    %13 = vsyncpa [#allocation5], 0
    // Predicated region
    $region2: #{actor_forward.1} parent=1 // pred_check
      _
    $region3: #{actor_forward.1} parent=1 // pred_check_branch
      %15 = sbr.rel (0) target = $region5
    $region4: #{actor_forward.1} parent=1 // pred_region
      _
    $region5: #{actor_forward.1} parent=1 // pred_fallthru
      _
    // Predicated region
    $region6: #{actor_forward.1} parent=1 // pred_check
      _
    $region7: #{actor_forward.1} parent=1 // pred_check_branch
      %17 = sbr.rel (0) target = $region9
    $region8: #{actor_forward.1} parent=1 // pred_region
      %s19 = ssub.s32 256, 256
      %20 = vsyncadd [#allocation3], %s19
      %s22 = sshll.u32 [#allocation2], 4
      %s23 = int_to_ptr.vmem [resolvable:$true] %s22
      %25 = dma.hbm_to_vmem [thread:$0]  %s1, 256, %s23, [#allocation3]
    $region9: #{actor_forward.1} parent=1 // pred_fallthru
      _
    // Predicated region
    $region10: #{actor_forward.1} parent=1 // pred_check
      _
    $region11: #{actor_forward.1} parent=1 // pred_check_branch
      %27 = sbr.rel (0) target = $region13
    $region12: #{actor_forward.1} parent=1 // pred_region
      _
    $region13: #{actor_forward.1} parent=1 // pred_fallthru
      _
    // Predicated region
    $region14: #{actor_forward.1} parent=1 // pred_check
      _
    $region15: #{actor_forward.1} parent=1 // pred_check_branch
      %29 = sbr.rel (0) target = $region17
    $region16: #{actor_forward.1} parent=1 // pred_region
      %s31 = ssub.s32 8192, 8192
      %32 = vsyncadd [#allocation5], %s31
      %s33 = sshll.u32 [#allocation4], 4
      %s34 = int_to_ptr.vmem [resolvable:$true] %s33
      %39 = dma.hbm_to_vmem [thread:$0]  %s3, 8192, %s34, [#allocation5], 256, 256, 16
    $region17: #{actor_forward.1} parent=1 // pred_fallthru
      _
    // Predicated region
    $region18: #{actor_forward.1} parent=1 // pred_check
      _
    $region19: #{actor_forward.1} parent=1 // pred_check_branch
      %41 = sbr.rel (0) target = $region21
    $region20: #{actor_forward.1} parent=1 // pred_region
      _
    $region21: #{actor_forward.1} parent=1 // pred_fallthru
      _
    // Predicated region
    $region22: #{actor_forward.1} parent=1 // pred_check
      _
    $region23: #{actor_forward.1} parent=1 // pred_check_branch
      %43 = sbr.rel (0) target = $region25
    $region24: #{actor_forward.1} parent=1 // pred_region
      %s45 = ssub.s32 4096, 4096
      %46 = vsyncadd [#allocation5], %s45
      %s47 = sshll.u32 [#allocation6], 4
      %s48 = int_to_ptr.vmem [resolvable:$true] %s47
      %53 = dma.hbm_to_vmem [thread:$0]  %s5, 4096, %s48, [#allocation5], 128, 128, 8
    $region25: #{actor_forward.1} parent=1 // pred_fallthru
      _
    // Predicated region
    $region26: #{actor_forward.1} parent=1 // pred_check
      _
    $region27: #{actor_forward.1} parent=1 // pred_check_branch
      %55 = sbr.rel (0) target = $region29
    $region28: #{actor_forward.1} parent=1 // pred_region
      _
    $region29: #{actor_forward.1} parent=1 // pred_fallthru
      _
    // Predicated region
    $region30: #{actor_forward.1} parent=1 // pred_check
      _
    $region31: #{actor_forward.1} parent=1 // pred_check_branch
      %57 = sbr.rel (0) target = $region33
    $region32: #{actor_forward.1} parent=1 // pred_region
      %58 = dma.done [#allocation3], 256
    $region33: #{actor_forward.1} parent=1 // pred_fallthru
      _
    // Predicated region
    $region34: #{actor_forward.1} parent=1 // pred_check
      _
    $region35: #{actor_forward.1} parent=1 // pred_check_branch
      %60 = sbr.rel (0) target = $region37
    $region36: #{actor_forward.1} parent=1 // pred_region
      %61 = dma.done [#allocation5], 8192
    $region37: #{actor_forward.1} parent=1 // pred_fallthru
      _
    // Predicated region
    $region38: #{actor_forward.1} parent=1 // pred_check
      _
    $region39: #{actor_forward.1} parent=1 // pred_check_branch
      %63 = sbr.rel (0) target = $region41
    $region40: #{actor_forward.1} parent=1 // pred_region
      %64 = dma.done [#allocation5], 4096
    $region41: #{actor_forward.1} parent=1 // pred_fallthru
      _
    %v65 = vld [vmem:[%s0] sm:$0xff]
    %v66 = vld [vmem:[#allocation2] sm:$0xff]
    %v67 = vld [vmem:[#allocation2 + $0x8] sm:$0xff]
    %v68 = vld [vmem:[%s2] sm:$0x3]
    %v70 = vlaneseq
    %v71 = vshrl.u32 %v70, 7
    %v72 = vsub.s32 0, %v71
    %v73 = vrot.slane %v68, %v72
    %v74 = vlaneseq
    %v75 = vshrl.u32 %v74, 7
    %v76 = vsub.s32 1, %v75
    %v77 = vrot.slane %v68, %v76
    %vm80 = vcmask 64512
    %v82 = vsel %vm80, %v65, 0
    %84 = vmatprep.subr.mxu0 %v67
    %85 = vmatpush1.msra.mxu0 %v66
    %86 = vmatprep.subr.mxu0 0.0
    %87 = vmatpush1.msra.mxu0 0.0
    %88 = vmatprep.subr.mxu0 0.0
    %89 = vmatpush1.msra.mxu0 0.0
    %90 = vmatprep.subr.mxu0 0.0
    %91 = vmatpush1.msra.mxu0 0.0
    %92 = vmatprep.subr.mxu0 0.0
    %93 = vmatpush1.msra.mxu0 0.0
    %94 = vmatprep.subr.mxu0 0.0
    %95 = vmatpush1.msra.mxu0 0.0
    %96 = vmatprep.subr.mxu0 0.0
    %97 = vmatpush1.msra.mxu0 0.0
    %98 = vmatprep.subr.mxu0 0.0
    %99 = vmatpush1.msra.mxu0 0.0
    %100 = vmatprep.subr.mxu0 0.0
    %101 = vmatpush1.msra.mxu0 0.0
    %102 = vmatprep.subr.mxu0 0.0
    %103 = vmatpush1.msra.mxu0 0.0
    %104 = vmatprep.subr.mxu0 0.0
    %105 = vmatpush1.msra.mxu0 0.0
    %106 = vmatprep.subr.mxu0 0.0
    %107 = vmatpush1.msra.mxu0 0.0
    %108 = vmatprep.subr.mxu0 0.0
    %109 = vmatpush1.msra.mxu0 0.0
    %110 = vmatprep.subr.mxu0 0.0
    %111 = vmatpush1.msra.mxu0 0.0
    %112 = vmatprep.subr.mxu0 0.0
    %113 = vmatpush1.msra.mxu0 0.0
    %114 = vmatprep.subr.mxu0 0.0
    %115 = vmatpush1.msra.mxu0 0.0
    %116 = vmatprep.subr.mxu0 0.0
    %117 = vmatpush1.msra.mxu0 0.0
    %118 = vmatprep.subr.mxu0 0.0
    %119 = vmatpush1.msra.mxu0 0.0
    %120 = vmatprep.subr.mxu0 0.0
    %121 = vmatpush1.msra.mxu0 0.0
    %122 = vmatprep.subr.mxu0 0.0
    %123 = vmatpush1.msra.mxu0 0.0
    %124 = vmatprep.subr.mxu0 0.0
    %125 = vmatpush1.msra.mxu0 0.0
    %126 = vmatprep.subr.mxu0 0.0
    %127 = vmatpush1.msra.mxu0 0.0
    %128 = vmatprep.subr.mxu0 0.0
    %129 = vmatpush1.msra.mxu0 0.0
    %130 = vmatprep.subr.mxu0 0.0
    %131 = vmatpush1.msra.mxu0 0.0
    %132 = vmatprep.subr.mxu0 0.0
    %133 = vmatpush1.msra.mxu0 0.0
    %134 = vmatprep.subr.mxu0 0.0
    %135 = vmatpush1.msra.mxu0 0.0
    %136 = vmatprep.subr.mxu0 0.0
    %137 = vmatpush1.msra.mxu0 0.0
    %138 = vmatprep.subr.mxu0 0.0
    %139 = vmatpush1.msra.mxu0 0.0
    %140 = vmatprep.subr.mxu0 0.0
    %141 = vmatpush1.msra.mxu0 0.0
    %142 = vmatprep.subr.mxu0 0.0
    %143 = vmatpush1.msra.mxu0 0.0
    %144 = vmatprep.subr.mxu0 0.0
    %145 = vmatpush1.msra.mxu0 0.0
    %146 = vmatprep.subr.mxu0 0.0
    %147 = vmatpush1.msra.mxu0 0.0
    %148 = vmatprep.mubr.f32.mxu0 0.0
    %149 = vmatmul.mubr.f32.gmra.mrb[0].mxu0 %v82
    %v150 = vpop.f32.mrb[0].mxu0
    %v151 = vadd.f32 %v73, %v150
    %v152 = vpop.f32.mrb[0].mxu0
    %v153 = vadd.f32 %v77, %v152
    %154 = vdwg.mxu0
    %v155 = vmax.f32 %v151, 0.0
    %v156 = vmax.f32 %v153, 0.0
    %v157 = vld [vmem:[#allocation4] sm:$0xff]
    %v158 = vld [vmem:[#allocation4 + $0x8] sm:$0xff]
    %v159 = vld [vmem:[#allocation4 + $0x10] sm:$0xff]
    %v160 = vld [vmem:[#allocation4 + $0x18] sm:$0xff]
    %v161 = vld [vmem:[#allocation4 + $0x20] sm:$0xff]
    %v162 = vld [vmem:[#allocation4 + $0x28] sm:$0xff]
    %v163 = vld [vmem:[#allocation4 + $0x30] sm:$0xff]
    %v164 = vld [vmem:[#allocation4 + $0x38] sm:$0xff]
    %v165 = vld [vmem:[#allocation4 + $0x40] sm:$0xff]
    %v166 = vld [vmem:[#allocation4 + $0x48] sm:$0xff]
    %v167 = vld [vmem:[#allocation4 + $0x50] sm:$0xff]
    %v168 = vld [vmem:[#allocation4 + $0x58] sm:$0xff]
    %v169 = vld [vmem:[#allocation4 + $0x60] sm:$0xff]
    %v170 = vld [vmem:[#allocation4 + $0x68] sm:$0xff]
    %v171 = vld [vmem:[#allocation4 + $0x70] sm:$0xff]
    %v172 = vld [vmem:[#allocation4 + $0x78] sm:$0xff]
    %v173 = vld [vmem:[#allocation4 + $0x80] sm:$0xff]
    %v174 = vld [vmem:[#allocation4 + $0x88] sm:$0xff]
    %v175 = vld [vmem:[#allocation4 + $0x90] sm:$0xff]
    %v176 = vld [vmem:[#allocation4 + $0x98] sm:$0xff]
    %v177 = vld [vmem:[#allocation4 + $0xa0] sm:$0xff]
    %v178 = vld [vmem:[#allocation4 + $0xa8] sm:$0xff]
    %v179 = vld [vmem:[#allocation4 + $0xb0] sm:$0xff]
    %v180 = vld [vmem:[#allocation4 + $0xb8] sm:$0xff]
    %v181 = vld [vmem:[#allocation4 + $0xc0] sm:$0xff]
    %v182 = vld [vmem:[#allocation4 + $0xc8] sm:$0xff]
    %v183 = vld [vmem:[#allocation4 + $0xd0] sm:$0xff]
    %v184 = vld [vmem:[#allocation4 + $0xd8] sm:$0xff]
    %v185 = vld [vmem:[#allocation4 + $0xe0] sm:$0xff]
    %v186 = vld [vmem:[#allocation4 + $0xe8] sm:$0xff]
    %v187 = vld [vmem:[#allocation4 + $0xf0] sm:$0xff]
    %v188 = vld [vmem:[#allocation4 + $0xf8] sm:$0xff]
    %v189 = vld [vmem:[#allocation4 + $0x100] sm:$0xff]
    %v190 = vld [vmem:[#allocation4 + $0x108] sm:$0xff]
    %v191 = vld [vmem:[#allocation4 + $0x110] sm:$0xff]
    %v192 = vld [vmem:[#allocation4 + $0x118] sm:$0xff]
    %v193 = vld [vmem:[#allocation4 + $0x120] sm:$0xff]
    %v194 = vld [vmem:[#allocation4 + $0x128] sm:$0xff]
    %v195 = vld [vmem:[#allocation4 + $0x130] sm:$0xff]
    %v196 = vld [vmem:[#allocation4 + $0x138] sm:$0xff]
    %v197 = vld [vmem:[#allocation4 + $0x140] sm:$0xff]
    %v198 = vld [vmem:[#allocation4 + $0x148] sm:$0xff]
    %v199 = vld [vmem:[#allocation4 + $0x150] sm:$0xff]
    %v200 = vld [vmem:[#allocation4 + $0x158] sm:$0xff]
    %v201 = vld [vmem:[#allocation4 + $0x160] sm:$0xff]
    %v202 = vld [vmem:[#allocation4 + $0x168] sm:$0xff]
    %v203 = vld [vmem:[#allocation4 + $0x170] sm:$0xff]
    %v204 = vld [vmem:[#allocation4 + $0x178] sm:$0xff]
    %v205 = vld [vmem:[#allocation4 + $0x180] sm:$0xff]
    %v206 = vld [vmem:[#allocation4 + $0x188] sm:$0xff]
    %v207 = vld [vmem:[#allocation4 + $0x190] sm:$0xff]
    %v208 = vld [vmem:[#allocation4 + $0x198] sm:$0xff]
    %v209 = vld [vmem:[#allocation4 + $0x1a0] sm:$0xff]
    %v210 = vld [vmem:[#allocation4 + $0x1a8] sm:$0xff]
    %v211 = vld [vmem:[#allocation4 + $0x1b0] sm:$0xff]
    %v212 = vld [vmem:[#allocation4 + $0x1b8] sm:$0xff]
    %v213 = vld [vmem:[#allocation4 + $0x1c0] sm:$0xff]
    %v214 = vld [vmem:[#allocation4 + $0x1c8] sm:$0xff]
    %v215 = vld [vmem:[#allocation4 + $0x1d0] sm:$0xff]
    %v216 = vld [vmem:[#allocation4 + $0x1d8] sm:$0xff]
    %v217 = vld [vmem:[#allocation4 + $0x1e0] sm:$0xff]
    %v218 = vld [vmem:[#allocation4 + $0x1e8] sm:$0xff]
    %v219 = vld [vmem:[#allocation4 + $0x1f0] sm:$0xff]
    %v220 = vld [vmem:[#allocation4 + $0x1f8] sm:$0xff]
    %v221 = vld [vmem:[%s4] sm:$0x3]
    %v223 = vlaneseq
    %v224 = vshrl.u32 %v223, 7
    %v225 = vsub.s32 0, %v224
    %v226 = vrot.slane %v221, %v225
    %v227 = vlaneseq
    %v228 = vshrl.u32 %v227, 7
    %v229 = vsub.s32 1, %v228
    %v230 = vrot.slane %v221, %v229
    %233 = vmatprep.subr.mxu0 %v158
    %234 = vmatpush1.msra.mxu0 %v157
    %235 = vmatprep.subr.mxu0 %v160
    %236 = vmatpush1.msra.mxu0 %v159
    %237 = vmatprep.subr.mxu0 %v162
    %238 = vmatpush1.msra.mxu0 %v161
    %239 = vmatprep.subr.mxu0 %v164
    %240 = vmatpush1.msra.mxu0 %v163
    %241 = vmatprep.subr.mxu0 %v166
    %242 = vmatpush1.msra.mxu0 %v165
    %243 = vmatprep.subr.mxu0 %v168
    %244 = vmatpush1.msra.mxu0 %v167
    %245 = vmatprep.subr.mxu0 %v170
    %246 = vmatpush1.msra.mxu0 %v169
    %247 = vmatprep.subr.mxu0 %v172
    %248 = vmatpush1.msra.mxu0 %v171
    %249 = vmatprep.subr.mxu0 %v174
    %250 = vmatpush1.msra.mxu0 %v173
    %251 = vmatprep.subr.mxu0 %v176
    %252 = vmatpush1.msra.mxu0 %v175
    %253 = vmatprep.subr.mxu0 %v178
    %254 = vmatpush1.msra.mxu0 %v177
    %255 = vmatprep.subr.mxu0 %v180
    %256 = vmatpush1.msra.mxu0 %v179
    %257 = vmatprep.subr.mxu0 %v182
    %258 = vmatpush1.msra.mxu0 %v181
    %259 = vmatprep.subr.mxu0 %v184
    %260 = vmatpush1.msra.mxu0 %v183
    %261 = vmatprep.subr.mxu0 %v186
    %262 = vmatpush1.msra.mxu0 %v185
    %263 = vmatprep.subr.mxu0 %v188
    %264 = vmatpush1.msra.mxu0 %v187
    %265 = vmatprep.subr.mxu0 %v190
    %266 = vmatpush1.msra.mxu0 %v189
    %267 = vmatprep.subr.mxu0 %v192
    %268 = vmatpush1.msra.mxu0 %v191
    %269 = vmatprep.subr.mxu0 %v194
    %270 = vmatpush1.msra.mxu0 %v193
    %271 = vmatprep.subr.mxu0 %v196
    %272 = vmatpush1.msra.mxu0 %v195
    %273 = vmatprep.subr.mxu0 %v198
    %274 = vmatpush1.msra.mxu0 %v197
    %275 = vmatprep.subr.mxu0 %v200
    %276 = vmatpush1.msra.mxu0 %v199
    %277 = vmatprep.subr.mxu0 %v202
    %278 = vmatpush1.msra.mxu0 %v201
    %279 = vmatprep.subr.mxu0 %v204
    %280 = vmatpush1.msra.mxu0 %v203
    %281 = vmatprep.subr.mxu0 %v206
    %282 = vmatpush1.msra.mxu0 %v205
    %283 = vmatprep.subr.mxu0 %v208
    %284 = vmatpush1.msra.mxu0 %v207
    %285 = vmatprep.subr.mxu0 %v210
    %286 = vmatpush1.msra.mxu0 %v209
    %287 = vmatprep.subr.mxu0 %v212
    %288 = vmatpush1.msra.mxu0 %v211
    %289 = vmatprep.subr.mxu0 %v214
    %290 = vmatpush1.msra.mxu0 %v213
    %291 = vmatprep.subr.mxu0 %v216
    %292 = vmatpush1.msra.mxu0 %v215
    %293 = vmatprep.subr.mxu0 %v218
    %294 = vmatpush1.msra.mxu0 %v217
    %295 = vmatprep.subr.mxu0 %v220
    %296 = vmatpush1.msra.mxu0 %v219
    %297 = vmatprep.mubr.f32.mxu0 %v156
    %298 = vmatmul.mubr.f32.gmra.mrb[0].mxu0 %v155
    %v299 = vpop.f32.mrb[0].mxu0
    %v300 = vadd.f32 %v226, %v299
    %v301 = vpop.f32.mrb[0].mxu0
    %v302 = vadd.f32 %v230, %v301
    %303 = vdwg.mxu0
    %v304 = vmax.f32 %v300, 0.0
    %v305 = vmax.f32 %v302, 0.0
    %v306 = vld [vmem:[#allocation6] sm:$0xff]
    %v307 = vld [vmem:[#allocation6 + $0x8] sm:$0xff]
    %v308 = vld [vmem:[#allocation6 + $0x10] sm:$0xff]
    %v309 = vld [vmem:[#allocation6 + $0x18] sm:$0xff]
    %v310 = vld [vmem:[#allocation6 + $0x20] sm:$0xff]
    %v311 = vld [vmem:[#allocation6 + $0x28] sm:$0xff]
    %v312 = vld [vmem:[#allocation6 + $0x30] sm:$0xff]
    %v313 = vld [vmem:[#allocation6 + $0x38] sm:$0xff]
    %v314 = vld [vmem:[#allocation6 + $0x40] sm:$0xff]
    %v315 = vld [vmem:[#allocation6 + $0x48] sm:$0xff]
    %v316 = vld [vmem:[#allocation6 + $0x50] sm:$0xff]
    %v317 = vld [vmem:[#allocation6 + $0x58] sm:$0xff]
    %v318 = vld [vmem:[#allocation6 + $0x60] sm:$0xff]
    %v319 = vld [vmem:[#allocation6 + $0x68] sm:$0xff]
    %v320 = vld [vmem:[#allocation6 + $0x70] sm:$0xff]
    %v321 = vld [vmem:[#allocation6 + $0x78] sm:$0xff]
    %v322 = vld [vmem:[#allocation6 + $0x80] sm:$0xff]
    %v323 = vld [vmem:[#allocation6 + $0x88] sm:$0xff]
    %v324 = vld [vmem:[#allocation6 + $0x90] sm:$0xff]
    %v325 = vld [vmem:[#allocation6 + $0x98] sm:$0xff]
    %v326 = vld [vmem:[#allocation6 + $0xa0] sm:$0xff]
    %v327 = vld [vmem:[#allocation6 + $0xa8] sm:$0xff]
    %v328 = vld [vmem:[#allocation6 + $0xb0] sm:$0xff]
    %v329 = vld [vmem:[#allocation6 + $0xb8] sm:$0xff]
    %v330 = vld [vmem:[#allocation6 + $0xc0] sm:$0xff]
    %v331 = vld [vmem:[#allocation6 + $0xc8] sm:$0xff]
    %v332 = vld [vmem:[#allocation6 + $0xd0] sm:$0xff]
    %v333 = vld [vmem:[#allocation6 + $0xd8] sm:$0xff]
    %v334 = vld [vmem:[#allocation6 + $0xe0] sm:$0xff]
    %v335 = vld [vmem:[#allocation6 + $0xe8] sm:$0xff]
    %v336 = vld [vmem:[#allocation6 + $0xf0] sm:$0xff]
    %v337 = vld [vmem:[#allocation6 + $0xf8] sm:$0xff]
    %v338 = vld [vmem:[%s6] sm:$0x1]
    %v340 = vlaneseq
    %v341 = vshrl.u32 %v340, 7
    %v342 = vsub.s32 0, %v341
    %v343 = vrot.slane %v338, %v342
    %345 = vmatprep.subr.mxu0 0.0
    %346 = vmatpush1.msra.mxu0 %v306
    %347 = vmatprep.subr.mxu0 0.0
    %348 = vmatpush1.msra.mxu0 %v307
    %349 = vmatprep.subr.mxu0 0.0
    %350 = vmatpush1.msra.mxu0 %v308
    %351 = vmatprep.subr.mxu0 0.0
    %352 = vmatpush1.msra.mxu0 %v309
    %353 = vmatprep.subr.mxu0 0.0
    %354 = vmatpush1.msra.mxu0 %v310
    %355 = vmatprep.subr.mxu0 0.0
    %356 = vmatpush1.msra.mxu0 %v311
    %357 = vmatprep.subr.mxu0 0.0
    %358 = vmatpush1.msra.mxu0 %v312
    %359 = vmatprep.subr.mxu0 0.0
    %360 = vmatpush1.msra.mxu0 %v313
    %361 = vmatprep.subr.mxu0 0.0
    %362 = vmatpush1.msra.mxu0 %v314
    %363 = vmatprep.subr.mxu0 0.0
    %364 = vmatpush1.msra.mxu0 %v315
    %365 = vmatprep.subr.mxu0 0.0
    %366 = vmatpush1.msra.mxu0 %v316
    %367 = vmatprep.subr.mxu0 0.0
    %368 = vmatpush1.msra.mxu0 %v317
    %369 = vmatprep.subr.mxu0 0.0
    %370 = vmatpush1.msra.mxu0 %v318
    %371 = vmatprep.subr.mxu0 0.0
    %372 = vmatpush1.msra.mxu0 %v319
    %373 = vmatprep.subr.mxu0 0.0
    %374 = vmatpush1.msra.mxu0 %v320
    %375 = vmatprep.subr.mxu0 0.0
    %376 = vmatpush1.msra.mxu0 %v321
    %377 = vmatprep.subr.mxu0 0.0
    %378 = vmatpush1.msra.mxu0 %v322
    %379 = vmatprep.subr.mxu0 0.0
    %380 = vmatpush1.msra.mxu0 %v323
    %381 = vmatprep.subr.mxu0 0.0
    %382 = vmatpush1.msra.mxu0 %v324
    %383 = vmatprep.subr.mxu0 0.0
    %384 = vmatpush1.msra.mxu0 %v325
    %385 = vmatprep.subr.mxu0 0.0
    %386 = vmatpush1.msra.mxu0 %v326
    %387 = vmatprep.subr.mxu0 0.0
    %388 = vmatpush1.msra.mxu0 %v327
    %389 = vmatprep.subr.mxu0 0.0
    %390 = vmatpush1.msra.mxu0 %v328
    %391 = vmatprep.subr.mxu0 0.0
    %392 = vmatpush1.msra.mxu0 %v329
    %393 = vmatprep.subr.mxu0 0.0
    %394 = vmatpush1.msra.mxu0 %v330
    %395 = vmatprep.subr.mxu0 0.0
    %396 = vmatpush1.msra.mxu0 %v331
    %397 = vmatprep.subr.mxu0 0.0
    %398 = vmatpush1.msra.mxu0 %v332
    %399 = vmatprep.subr.mxu0 0.0
    %400 = vmatpush1.msra.mxu0 %v333
    %401 = vmatprep.subr.mxu0 0.0
    %402 = vmatpush1.msra.mxu0 %v334
    %403 = vmatprep.subr.mxu0 0.0
    %404 = vmatpush1.msra.mxu0 %v335
    %405 = vmatprep.subr.mxu0 0.0
    %406 = vmatpush1.msra.mxu0 %v336
    %407 = vmatprep.subr.mxu0 0.0
    %408 = vmatpush1.msra.mxu0 %v337
    %409 = vmatprep.mubr.f32.mxu0 %v305
    %410 = vmatmul.mubr.f32.gmra.mrb[0].mxu0 %v304
    %v411 = vpop.f32.mrb[0].mxu0
    %v412 = vadd.f32 %v343, %v411
    %v413 = vpop.f32.mrb[0].mxu0
    %414 = vdwg.mxu0
    %v415 = vtanh.pop %v412
    %vm416 = vcmask 7168
    %417 = vst.msk [vmem:[%s7] sm:$0xff] %vm416, %v415
    // Predicated region
    $region42: #{actor_forward.1} parent=1 // pred_check
      _
    $region43: #{actor_forward.1} parent=1 // pred_check_branch
      %419 = sbr.rel (0) target = $region45
    $region44: #{actor_forward.1} parent=1 // pred_region
      _
    $region45: #{actor_forward.1} parent=1 // pred_fallthru
      _
    // Predicated region
    $region46: #{actor_forward.1} parent=1 // pred_check
      _
    $region47: #{actor_forward.1} parent=1 // pred_check_branch
      %421 = sbr.rel (0) target = $region49
    $region48: #{actor_forward.1} parent=1 // pred_region
      _
    $region49: #{actor_forward.1} parent=1 // pred_fallthru
      _
    %422 = vsyncpa [#allocation3], 1
    %423 = vsyncpa [#allocation5], 1

</llo_original>
